<compile_context>
chip_gen: v6e
topology: v6e:2x2x1
jax: 0.10.0
libtpu: 0.0.40
codegen_flags: <defaults>
</compile_context>

<pallas_src>
import functools

import jax
import jax.numpy as jnp
from jax.experimental import pallas as pl
from jax.experimental.pallas import tpu as pltpu


def _round_up(a: int, m: int) -> int:
    return (a + m - 1) // m * m


def mlp_kernel(x_ref, ws_ref, bs_ref, wh_ref, bh_ref, we_ref, be_ref, o_ref):
    """One batch tile: tanh(x@Ws+bs) -> L x tanh(h@Wh+bh) -> h@We+be."""
    x = x_ref[...]                      # (TB, D_in) f32
    d_in = x.shape[1]

    # ---- input layer -------------------------------------------------------
    if d_in <= 8:
        # Tiny contraction: VPU rank-1 updates instead of a nearly-empty MXU pass.
        ws = ws_ref[...]                # (D_in, H) f32
        pre = bs_ref[...]               # (1, H) -> broadcasts to (TB, H)
        for d in range(d_in):
            pre = pre + x[:, d:d + 1] * ws[d:d + 1, :]
        h = jnp.tanh(pre)
    else:
        h = jnp.tanh(
            jnp.dot(x.astype(jnp.bfloat16), ws_ref[...].astype(jnp.bfloat16),
                    preferred_element_type=jnp.float32)
            + bs_ref[...]
        )

    # ---- hidden layers (fully unrolled; num_layers is static) ---------------
    num_layers = wh_ref.shape[0]
    for i in range(num_layers):
        w = wh_ref[i].astype(jnp.bfloat16)     # (H, H) bf16 MXU operand
        b = bh_ref[i]                          # (1, H) f32
        h = jnp.tanh(
            jnp.dot(h.astype(jnp.bfloat16), w, preferred_element_type=jnp.float32)
            + b
        )

    # ---- output layer (lane-dense; padded to 128 lanes by the wrapper) ------
    o_ref[...] = (
        jnp.dot(h.astype(jnp.bfloat16), we_ref[...].astype(jnp.bfloat16),
                preferred_element_type=jnp.float32)
        + be_ref[...]
    ).astype(o_ref.dtype)


@functools.partial(jax.jit, static_argnames=("block_b",))
def mul_layer_net(x, w_start, b_start, w_hidden, b_hidden, w_end, b_end,
                  *, block_b: int = 128):
    B, D_in = x.shape
    H = w_start.shape[1]
    L = w_hidden.shape[0]
    D_out = w_end.shape[1]
    LANE = 128

    # Lane-dense output: pad the last layer to a multiple of 128 output lanes.
    D_pad = _round_up(max(D_out, 1), LANE)
    if D_pad != D_out:
        w_end_p = jnp.zeros((H, D_pad), w_end.dtype).at[:, :D_out].set(w_end)
        b_end_p = jnp.zeros((1, D_pad), b_end.dtype).at[:, :D_out].set(b_end)
    else:
        w_end_p, b_end_p = w_end, b_end

    # Batch tile: multiple of 8 (f32 sublanes), capped at block_b; pad B if needed.
    TB = min(_round_up(block_b, 8), _round_up(B, 8))
    B_pad = _round_up(B, TB)
    if B_pad != B:
        x_p = jnp.zeros((B_pad, D_in), x.dtype).at[:B, :].set(x)
    else:
        x_p = x

    grid = (B_pad // TB,)

    # Everything except x / out stays resident in VMEM across the whole grid.
    def resident(shape):
        return pl.BlockSpec(shape, lambda i: (0,) * len(shape))

    in_specs = [
        pl.BlockSpec((TB, D_in), lambda i: (i, 0)),   # x       (batch-tiled)
        resident((D_in, H)),                          # w_start
        resident((1, H)),                             # b_start
        resident((L, H, H)),                          # w_hidden
        resident((L, 1, H)),                          # b_hidden
        resident((H, D_pad)),                         # w_end   (lane-padded)
        resident((1, D_pad)),                         # b_end   (lane-padded)
    ]
    out_specs = pl.BlockSpec((TB, D_pad), lambda i: (i, 0))

    # Advisory cost + VMEM sizing (resident weights + double-buffered I/O tiles).
    F32 = 4
    resident_bytes = F32 * (D_in * H + H + L * H * H + L * H + H * D_pad + D_pad)
    tile_bytes = F32 * (2 * TB * D_in + 2 * TB * D_pad + 4 * TB * H)
    vmem_limit = int(min(64 * 1024 * 1024,
                         max(32 * 1024 * 1024, 2 * (resident_bytes + tile_bytes))))
    cost = pl.CostEstimate(
        flops=2 * B_pad * (D_in * H + L * H * H + H * D_pad),
        transcendentals=B_pad * H * (L + 1),
        bytes_accessed=F32 * (B_pad * D_in + B_pad * D_pad) + resident_bytes,
    )

    y_pad = pl.pallas_call(
        mlp_kernel,
        out_shape=jax.ShapeDtypeStruct((B_pad, D_pad), jnp.float32),
        grid=grid,
        in_specs=in_specs,
        out_specs=out_specs,
        compiler_params=pltpu.CompilerParams(
            dimension_semantics=("parallel",),
            vmem_limit_bytes=vmem_limit,
        ),
        cost_estimate=cost,
    )(x_p, w_start, b_start, w_hidden, b_hidden, w_end_p, b_end_p)

    return y_pad[:B, :D_out]


def init_params(key, D_in, num_layers, layer_size, D_out):
    """Deterministic synthetic init. Weights pre-transposed to (in, out): kernel does x @ W + b."""
    keys = jax.random.split(key, 6)
    scale = 0.1
    w_start = scale * jax.random.normal(keys[0], (D_in, layer_size), jnp.float32)
    b_start = scale * jax.random.normal(keys[1], (1, layer_size), jnp.float32)
    w_hidden = scale * jax.random.normal(
        keys[2], (num_layers, layer_size, layer_size), jnp.float32)
    b_hidden = scale * jax.random.normal(
        keys[3], (num_layers, 1, layer_size), jnp.float32)
    w_end = scale * jax.random.normal(keys[4], (layer_size, D_out), jnp.float32)
    b_end = scale * jax.random.normal(keys[5], (1, D_out), jnp.float32)
    return w_start, b_start, w_hidden, b_hidden, w_end, b_end


def reference_forward(x, w_start, b_start, w_hidden, b_hidden, w_end, b_end,
                      matmul_dtype=jnp.float32):
    """MulLayerNet.forward. matmul_dtype=bfloat16 mirrors the kernel's MXU operand cast
    (f32 accumulation); the first layer (tiny K) stays f32, matching the kernel's VPU path."""
    cast = lambda a: a.astype(matmul_dtype)
    h = jnp.tanh(x @ w_start + b_start)
    for i in range(w_hidden.shape[0]):
        h = jnp.tanh(
            jnp.dot(cast(h), cast(w_hidden[i]), preferred_element_type=jnp.float32)
            + b_hidden[i]
        )
    return jnp.dot(cast(h), cast(w_end), preferred_element_type=jnp.float32) + b_end


if __name__ == "__main__":
    # Small shapes consistent with the module (2D problem -> D_in=2, scalar output).
    # B=200 with TB=128 exercises the batch grid (2 steps) and the padding path.
    B, D_in, num_layers, layer_size, D_out = 200, 2, 3, 32, 1

    key = jax.random.PRNGKey(0)
    kx, kp = jax.random.split(key)
    x = jax.random.normal(kx, (B, D_in), jnp.float32)
    params = init_params(kp, D_in, num_layers, layer_size, D_out)

    y = mul_layer_net(x, *params)
    y = jax.block_until_ready(y)
    assert y.shape == (B, D_out)

    # Tight check vs. a reference that mirrors the kernel's bf16-operand matmuls.
    y_ref_mx = reference_forward(x, *params, matmul_dtype=jnp.bfloat16)
    err_mx = float(jnp.max(jnp.abs(y - y_ref_mx)))
    assert jnp.allclose(y, y_ref_mx, atol=1e-4, rtol=1e-4), err_mx

    # Loose check vs. pure-f32 module semantics (only bf16 operand quantization differs).
    y_ref_f32 = reference_forward(x, *params, matmul_dtype=jnp.float32)
    err_f32 = float(jnp.max(jnp.abs(y - y_ref_f32)))
    assert jnp.allclose(y, y_ref_f32, atol=5e-2, rtol=5e-2), err_f32

    print("KERNEL_OK")
</pallas_src>

<mosaic_0001>
module attributes {stable_mosaic.version = 11 : i64} {
  func.func @mlp_kernel(%arg0: i32, %arg1: memref<128x2xf32, #tpu.memory_space<vmem>>, %arg2: memref<2x32xf32, #tpu.memory_space<vmem>>, %arg3: memref<1x32xf32, #tpu.memory_space<vmem>>, %arg4: memref<3x32x32xf32, #tpu.memory_space<vmem>>, %arg5: memref<3x1x32xf32, #tpu.memory_space<vmem>>, %arg6: memref<32x128xf32, #tpu.memory_space<vmem>>, %arg7: memref<1x128xf32, #tpu.memory_space<vmem>>, %arg8: memref<128x128xf32, #tpu.memory_space<vmem>>) attributes {dimension_semantics = [#tpu.dimension_semantics<parallel>], iteration_bounds = array<i64: 2>, scalar_prefetch = 0 : i64, scratch_operands = 0 : i64, tpu.core_type = #tpu.core_type<tc>, window_params = [{transform_indices = @transform_0, window_bounds = array<i64: 128, 2>}, {pipeline_mode = #tpu.pipeline_mode<synchronous>, transform_indices = @transform_1, window_bounds = array<i64: 2, 32>}, {pipeline_mode = #tpu.pipeline_mode<synchronous>, transform_indices = @transform_2, window_bounds = array<i64: 1, 32>}, {pipeline_mode = #tpu.pipeline_mode<synchronous>, transform_indices = @transform_3, window_bounds = array<i64: 3, 32, 32>}, {pipeline_mode = #tpu.pipeline_mode<synchronous>, transform_indices = @transform_4, window_bounds = array<i64: 3, 1, 32>}, {pipeline_mode = #tpu.pipeline_mode<synchronous>, transform_indices = @transform_5, window_bounds = array<i64: 32, 128>}, {pipeline_mode = #tpu.pipeline_mode<synchronous>, transform_indices = @transform_6, window_bounds = array<i64: 1, 128>}, {transform_indices = @transform_7, window_bounds = array<i64: 128, 128>}]} {
    %c0 = arith.constant 0 : index
    %c0_0 = arith.constant 0 : index
    %0 = vector.load %arg1[%c0, %c0_0] : memref<128x2xf32, #tpu.memory_space<vmem>>, vector<128x2xf32>
    %c0_1 = arith.constant 0 : index
    %c0_2 = arith.constant 0 : index
    %1 = vector.load %arg2[%c0_1, %c0_2] : memref<2x32xf32, #tpu.memory_space<vmem>>, vector<2x32xf32>
    %c0_3 = arith.constant 0 : index
    %c0_4 = arith.constant 0 : index
    %2 = vector.load %arg3[%c0_3, %c0_4] : memref<1x32xf32, #tpu.memory_space<vmem>>, vector<1x32xf32>
    %3 = vector.extract_strided_slice %0 {offsets = [0, 0], sizes = [128, 1], strides = [1, 1]} : vector<128x2xf32> to vector<128x1xf32>
    %4 = vector.extract_strided_slice %1 {offsets = [0, 0], sizes = [1, 32], strides = [1, 1]} : vector<2x32xf32> to vector<1x32xf32>
    %5 = vector.broadcast %3 : vector<128x1xf32> to vector<128x32xf32>
    %6 = vector.broadcast %4 : vector<1x32xf32> to vector<128x32xf32>
    %7 = arith.mulf %5, %6 : vector<128x32xf32>
    %8 = vector.broadcast %2 : vector<1x32xf32> to vector<128x32xf32>
    %9 = arith.addf %8, %7 : vector<128x32xf32>
    %10 = vector.extract_strided_slice %0 {offsets = [0, 1], sizes = [128, 1], strides = [1, 1]} : vector<128x2xf32> to vector<128x1xf32>
    %11 = vector.extract_strided_slice %1 {offsets = [1, 0], sizes = [1, 32], strides = [1, 1]} : vector<2x32xf32> to vector<1x32xf32>
    %12 = vector.broadcast %10 : vector<128x1xf32> to vector<128x32xf32>
    %13 = vector.broadcast %11 : vector<1x32xf32> to vector<128x32xf32>
    %14 = arith.mulf %12, %13 : vector<128x32xf32>
    %15 = arith.addf %9, %14 : vector<128x32xf32>
    %16 = math.tanh %15 : vector<128x32xf32>
    %c0_5 = arith.constant 0 : index
    %c0_6 = arith.constant 0 : index
    %c0_7 = arith.constant 0 : index
    %17 = vector.load %arg4[%c0_5, %c0_6, %c0_7] : memref<3x32x32xf32, #tpu.memory_space<vmem>>, vector<1x32x32xf32>
    %18 = vector.shape_cast %17 : vector<1x32x32xf32> to vector<32x32xf32>
    %19 = arith.truncf %18 : vector<32x32xf32> to vector<32x32xbf16>
    %c0_8 = arith.constant 0 : index
    %c0_9 = arith.constant 0 : index
    %c0_10 = arith.constant 0 : index
    %20 = vector.load %arg5[%c0_8, %c0_9, %c0_10] : memref<3x1x32xf32, #tpu.memory_space<vmem>>, vector<1x1x32xf32>
    %21 = vector.shape_cast %20 : vector<1x1x32xf32> to vector<1x32xf32>
    %22 = arith.truncf %16 : vector<128x32xf32> to vector<128x32xbf16>
    %cst = arith.constant dense<0.000000e+00> : vector<128x32xf32>
    %23 = tpu.matmul %22, %19, %cst {dimension_numbers = #tpu.dot_dimension_numbers<[1], [0], [0], [1], [0, 0, 1, 1], [], []>} : vector<128x32xbf16>, vector<32x32xbf16>, vector<128x32xf32> -> vector<128x32xf32>
    %24 = vector.broadcast %21 : vector<1x32xf32> to vector<128x32xf32>
    %25 = arith.addf %23, %24 : vector<128x32xf32>
    %26 = math.tanh %25 : vector<128x32xf32>
    %c1 = arith.constant 1 : index
    %c0_11 = arith.constant 0 : index
    %c0_12 = arith.constant 0 : index
    %27 = vector.load %arg4[%c1, %c0_11, %c0_12] : memref<3x32x32xf32, #tpu.memory_space<vmem>>, vector<1x32x32xf32>
    %28 = vector.shape_cast %27 : vector<1x32x32xf32> to vector<32x32xf32>
    %29 = arith.truncf %28 : vector<32x32xf32> to vector<32x32xbf16>
    %c1_13 = arith.constant 1 : index
    %c0_14 = arith.constant 0 : index
    %c0_15 = arith.constant 0 : index
    %30 = vector.load %arg5[%c1_13, %c0_14, %c0_15] : memref<3x1x32xf32, #tpu.memory_space<vmem>>, vector<1x1x32xf32>
    %31 = vector.shape_cast %30 : vector<1x1x32xf32> to vector<1x32xf32>
    %32 = arith.truncf %26 : vector<128x32xf32> to vector<128x32xbf16>
    %cst_16 = arith.constant dense<0.000000e+00> : vector<128x32xf32>
    %33 = tpu.matmul %32, %29, %cst_16 {dimension_numbers = #tpu.dot_dimension_numbers<[1], [0], [0], [1], [0, 0, 1, 1], [], []>} : vector<128x32xbf16>, vector<32x32xbf16>, vector<128x32xf32> -> vector<128x32xf32>
    %34 = vector.broadcast %31 : vector<1x32xf32> to vector<128x32xf32>
    %35 = arith.addf %33, %34 : vector<128x32xf32>
    %36 = math.tanh %35 : vector<128x32xf32>
    %c2 = arith.constant 2 : index
    %c0_17 = arith.constant 0 : index
    %c0_18 = arith.constant 0 : index
    %37 = vector.load %arg4[%c2, %c0_17, %c0_18] : memref<3x32x32xf32, #tpu.memory_space<vmem>>, vector<1x32x32xf32>
    %38 = vector.shape_cast %37 : vector<1x32x32xf32> to vector<32x32xf32>
    %39 = arith.truncf %38 : vector<32x32xf32> to vector<32x32xbf16>
    %c2_19 = arith.constant 2 : index
    %c0_20 = arith.constant 0 : index
    %c0_21 = arith.constant 0 : index
    %40 = vector.load %arg5[%c2_19, %c0_20, %c0_21] : memref<3x1x32xf32, #tpu.memory_space<vmem>>, vector<1x1x32xf32>
    %41 = vector.shape_cast %40 : vector<1x1x32xf32> to vector<1x32xf32>
    %42 = arith.truncf %36 : vector<128x32xf32> to vector<128x32xbf16>
    %cst_22 = arith.constant dense<0.000000e+00> : vector<128x32xf32>
    %43 = tpu.matmul %42, %39, %cst_22 {dimension_numbers = #tpu.dot_dimension_numbers<[1], [0], [0], [1], [0, 0, 1, 1], [], []>} : vector<128x32xbf16>, vector<32x32xbf16>, vector<128x32xf32> -> vector<128x32xf32>
    %44 = vector.broadcast %41 : vector<1x32xf32> to vector<128x32xf32>
    %45 = arith.addf %43, %44 : vector<128x32xf32>
    %46 = math.tanh %45 : vector<128x32xf32>
    %47 = arith.truncf %46 : vector<128x32xf32> to vector<128x32xbf16>
    %c0_23 = arith.constant 0 : index
    %c0_24 = arith.constant 0 : index
    %48 = vector.load %arg6[%c0_23, %c0_24] : memref<32x128xf32, #tpu.memory_space<vmem>>, vector<32x128xf32>
    %49 = arith.truncf %48 : vector<32x128xf32> to vector<32x128xbf16>
    %cst_25 = arith.constant dense<0.000000e+00> : vector<128x128xf32>
    %50 = tpu.matmul %47, %49, %cst_25 {dimension_numbers = #tpu.dot_dimension_numbers<[1], [0], [0], [1], [0, 0, 1, 1], [], []>} : vector<128x32xbf16>, vector<32x128xbf16>, vector<128x128xf32> -> vector<128x128xf32>
    %c0_26 = arith.constant 0 : index
    %c0_27 = arith.constant 0 : index
    %51 = vector.load %arg7[%c0_26, %c0_27] : memref<1x128xf32, #tpu.memory_space<vmem>>, vector<1x128xf32>
    %52 = vector.broadcast %51 : vector<1x128xf32> to vector<128x128xf32>
    %53 = arith.addf %50, %52 : vector<128x128xf32>
    %c0_28 = arith.constant 0 : index
    %c0_29 = arith.constant 0 : index
    %54 = vector.load %arg8[%c0_28, %c0_29] : memref<128x128xf32, #tpu.memory_space<vmem>>, vector<128x128xf32>
    tpu.vector_store %arg8[%c0_28, %c0_29], %53 {strides = array<i32>} : memref<128x128xf32, #tpu.memory_space<vmem>>, vector<128x128xf32>,
    return
  }
  func.func @transform_0(%arg0: i32) -> (i32, i32) {
    %c0_i32 = arith.constant 0 : i32
    %c0_i32_0 = arith.constant 0 : i32
    return %arg0, %c0_i32 : i32, i32
  }
  func.func @transform_1(%arg0: i32) -> (i32, i32) {
    %c0_i32 = arith.constant 0 : i32
    %c0_i32_0 = arith.constant 0 : i32
    %c0_i32_1 = arith.constant 0 : i32
    return %c0_i32, %c0_i32_0 : i32, i32
  }
  func.func @transform_2(%arg0: i32) -> (i32, i32) {
    %c0_i32 = arith.constant 0 : i32
    %c0_i32_0 = arith.constant 0 : i32
    %c0_i32_1 = arith.constant 0 : i32
    return %c0_i32, %c0_i32_0 : i32, i32
  }
  func.func @transform_3(%arg0: i32) -> (i32, i32, i32) {
    %c0_i32 = arith.constant 0 : i32
    %c0_i32_0 = arith.constant 0 : i32
    %c0_i32_1 = arith.constant 0 : i32
    %c0_i32_2 = arith.constant 0 : i32
    return %c0_i32, %c0_i32_0, %c0_i32_1 : i32, i32, i32
  }
  func.func @transform_4(%arg0: i32) -> (i32, i32, i32) {
    %c0_i32 = arith.constant 0 : i32
    %c0_i32_0 = arith.constant 0 : i32
    %c0_i32_1 = arith.constant 0 : i32
    %c0_i32_2 = arith.constant 0 : i32
    return %c0_i32, %c0_i32_0, %c0_i32_1 : i32, i32, i32
  }
  func.func @transform_5(%arg0: i32) -> (i32, i32) {
    %c0_i32 = arith.constant 0 : i32
    %c0_i32_0 = arith.constant 0 : i32
    %c0_i32_1 = arith.constant 0 : i32
    return %c0_i32, %c0_i32_0 : i32, i32
  }
  func.func @transform_6(%arg0: i32) -> (i32, i32) {
    %c0_i32 = arith.constant 0 : i32
    %c0_i32_0 = arith.constant 0 : i32
    %c0_i32_1 = arith.constant 0 : i32
    return %c0_i32, %c0_i32_0 : i32, i32
  }
  func.func @transform_7(%arg0: i32) -> (i32, i32) {
    %c0_i32 = arith.constant 0 : i32
    %c0_i32_0 = arith.constant 0 : i32
    return %arg0, %c0_i32 : i32, i32
  }
}

</mosaic_0001>

<llo_original>
// kernel: mul_layer_net.1
$region0: #{mul_layer_net.1}
  #allocation0 [shape = 'u32[]', space=smem, size = 0x4, offset = 0x4, fixed_abs, tag = 'smem constant byte address 0x4 - core index']
  #allocation1 [shape = 'u32[144,128]{1,0:T(1,128)}', space=vmem, size = 0x12000, scoped, tag = 'internal scratch']
  %s0 = inlined_call_operand.vmem [shape: f32[256,2], index: 0, kind: input, shape index: {}]
  %s1 = inlined_call_operand.vmem [shape: f32[2,32], index: 1, kind: input, shape index: {}]
  %s2 = inlined_call_operand.vmem [shape: f32[1,32], index: 2, kind: input, shape index: {}]
  %s3 = inlined_call_operand.vmem [shape: f32[3,32,32], index: 3, kind: input, shape index: {}]
  %s4 = inlined_call_operand.vmem [shape: f32[3,1,32], index: 4, kind: input, shape index: {}]
  %s5 = inlined_call_operand.vmem [shape: f32[32,128], index: 5, kind: input, shape index: {}]
  %s6 = inlined_call_operand.vmem [shape: f32[1,128], index: 6, kind: input, shape index: {}]
  %s7 = inlined_call_operand.vmem [shape: f32[256,128], index: 7, kind: output, shape index: {}]
  %s8 = sld [smem:[#allocation0]]
  $region61: #{mul_layer_net.1} parent=0
    _
  %s10 = ssub.s32 1, %s8
  %s11 = scalar_select 0, %s10, %s8
  loop: start=0, step=1, limit=4
  $region2: #{mul_layer_net.1} parent=0 // loop_pre_header
    _
  $region3: #{mul_layer_net.1} parent=0 // loop_header
    %s13 = sphi 0, %s17
    %p14 = scmp.ge.s32.totalorder %s13, 4
    %s23 = sphi 0, %s25
    %s26 = sphi 0, %s23
    %s27 = sphi 0, %s26
    %s43 = sphi 0, %s27
    %s47 = sphi 0, %s47
    %s49 = sphi 0, %s47
    %s50 = sphi 0, %s49
    %s64 = sphi 0, %s50
    %s68 = sphi 0, %s68
    %s70 = sphi 0, %s68
    %s71 = sphi 0, %s70
    %s85 = sphi 0, %s71
    %s89 = sphi 0, %s89
    %s91 = sphi 0, %s89
    %s92 = sphi 0, %s91
    %s106 = sphi 0, %s92
    %s110 = sphi 0, %s110
    %s112 = sphi 0, %s110
    %s113 = sphi 0, %s112
    %s127 = sphi 0, %s113
    %s131 = sphi 0, %s131
    %s133 = sphi 0, %s131
    %s134 = sphi 0, %s133
    %s148 = sphi 0, %s134
    %s152 = sphi 0, %s152
    %s154 = sphi 0, %s152
    %s155 = sphi 0, %s154
    %s169 = sphi 0, %s155
    %s175 = sphi 0, %s177
    %s178 = sphi 0, %s175
    %s179 = sphi 0, %s178
    %s195 = sphi 0, %s179
  $region4: #{mul_layer_net.1} parent=0 // loop_header_branch
    %16 = sbr.rel (%p14) target = $region8
  $region5: #{mul_layer_net.1} parent=0 // loop_body
    %s18 = ssub.s32 %s13, 1
    %s19 = ssub.s32 %s13, 2
    %s20 = sadd.s32 %s13, 1
    %s21 = ssub.s32 %s13, %s20
    %p22 = scmp.eq.s32.totalorder %s21, 0
    %s24 = sadd.s32 %s23, 1
    %s25 = scalar_select %p22, %s23, %s24
    %p28 = pneg %p22
    %p29 = scmp.eq.s32.totalorder %s13, 1
    %p30 = por %p28, %p29
    %p31 = scmp.ne.s32.totalorder %s23, %s26
    %p32 = scmp.eq.s32.totalorder %s13, 0
    %p33 = por %p31, %p32
    %p34 = scmp.ne.s32.totalorder %s23, %s26
    %p35 = scmp.eq.s32.totalorder %s18, 1
    %p36 = por %p34, %p35
    %p37 = scmp.ne.s32.totalorder %s26, %s27
    %p38 = scmp.eq.s32.totalorder %s18, 0
    %p39 = por %p37, %p38
    %p40 = scmp.ne.s32.totalorder %s26, %s27
    %p41 = scmp.eq.s32.totalorder %s19, 1
    %p42 = por %p40, %p41
    %p44 = scmp.ne.s32.totalorder %s27, %s43
    %p45 = scmp.eq.s32.totalorder %s19, 0
    %p46 = por %p44, %p45
    %s48 = sadd.s32 %s47, 1
    %p51 = scmp.eq.s32.totalorder %s13, 1
    %p52 = scmp.ne.s32.totalorder %s47, %s49
    %p53 = scmp.eq.s32.totalorder %s13, 0
    %p54 = por %p52, %p53
    %p55 = scmp.ne.s32.totalorder %s47, %s49
    %p56 = scmp.eq.s32.totalorder %s18, 1
    %p57 = por %p55, %p56
    %p58 = scmp.ne.s32.totalorder %s49, %s50
    %p59 = scmp.eq.s32.totalorder %s18, 0
    %p60 = por %p58, %p59
    %p61 = scmp.ne.s32.totalorder %s49, %s50
    %p62 = scmp.eq.s32.totalorder %s19, 1
    %p63 = por %p61, %p62
    %p65 = scmp.ne.s32.totalorder %s50, %s64
    %p66 = scmp.eq.s32.totalorder %s19, 0
    %p67 = por %p65, %p66
    %s69 = sadd.s32 %s68, 1
    %p72 = scmp.eq.s32.totalorder %s13, 1
    %p73 = scmp.ne.s32.totalorder %s68, %s70
    %p74 = scmp.eq.s32.totalorder %s13, 0
    %p75 = por %p73, %p74
    %p76 = scmp.ne.s32.totalorder %s68, %s70
    %p77 = scmp.eq.s32.totalorder %s18, 1
    %p78 = por %p76, %p77
    %p79 = scmp.ne.s32.totalorder %s70, %s71
    %p80 = scmp.eq.s32.totalorder %s18, 0
    %p81 = por %p79, %p80
    %p82 = scmp.ne.s32.totalorder %s70, %s71
    %p83 = scmp.eq.s32.totalorder %s19, 1
    %p84 = por %p82, %p83
    %p86 = scmp.ne.s32.totalorder %s71, %s85
    %p87 = scmp.eq.s32.totalorder %s19, 0
    %p88 = por %p86, %p87
    %s90 = sadd.s32 %s89, 1
    %p93 = scmp.eq.s32.totalorder %s13, 1
    %p94 = scmp.ne.s32.totalorder %s89, %s91
    %p95 = scmp.eq.s32.totalorder %s13, 0
    %p96 = por %p94, %p95
    %p97 = scmp.ne.s32.totalorder %s89, %s91
    %p98 = scmp.eq.s32.totalorder %s18, 1
    %p99 = por %p97, %p98
    %p100 = scmp.ne.s32.totalorder %s91, %s92
    %p101 = scmp.eq.s32.totalorder %s18, 0
    %p102 = por %p100, %p101
    %p103 = scmp.ne.s32.totalorder %s91, %s92
    %p104 = scmp.eq.s32.totalorder %s19, 1
    %p105 = por %p103, %p104
    %p107 = scmp.ne.s32.totalorder %s92, %s106
    %p108 = scmp.eq.s32.totalorder %s19, 0
    %p109 = por %p107, %p108
    %s111 = sadd.s32 %s110, 1
    %p114 = scmp.eq.s32.totalorder %s13, 1
    %p115 = scmp.ne.s32.totalorder %s110, %s112
    %p116 = scmp.eq.s32.totalorder %s13, 0
    %p117 = por %p115, %p116
    %p118 = scmp.ne.s32.totalorder %s110, %s112
    %p119 = scmp.eq.s32.totalorder %s18, 1
    %p120 = por %p118, %p119
    %p121 = scmp.ne.s32.totalorder %s112, %s113
    %p122 = scmp.eq.s32.totalorder %s18, 0
    %p123 = por %p121, %p122
    %p124 = scmp.ne.s32.totalorder %s112, %s113
    %p125 = scmp.eq.s32.totalorder %s19, 1
    %p126 = por %p124, %p125
    %p128 = scmp.ne.s32.totalorder %s113, %s127
    %p129 = scmp.eq.s32.totalorder %s19, 0
    %p130 = por %p128, %p129
    %s132 = sadd.s32 %s131, 1
    %p135 = scmp.eq.s32.totalorder %s13, 1
    %p136 = scmp.ne.s32.totalorder %s131, %s133
    %p137 = scmp.eq.s32.totalorder %s13, 0
    %p138 = por %p136, %p137
    %p139 = scmp.ne.s32.totalorder %s131, %s133
    %p140 = scmp.eq.s32.totalorder %s18, 1
    %p141 = por %p139, %p140
    %p142 = scmp.ne.s32.totalorder %s133, %s134
    %p143 = scmp.eq.s32.totalorder %s18, 0
    %p144 = por %p142, %p143
    %p145 = scmp.ne.s32.totalorder %s133, %s134
    %p146 = scmp.eq.s32.totalorder %s19, 1
    %p147 = por %p145, %p146
    %p149 = scmp.ne.s32.totalorder %s134, %s148
    %p150 = scmp.eq.s32.totalorder %s19, 0
    %p151 = por %p149, %p150
    %s153 = sadd.s32 %s152, 1
    %p156 = scmp.eq.s32.totalorder %s13, 1
    %p157 = scmp.ne.s32.totalorder %s152, %s154
    %p158 = scmp.eq.s32.totalorder %s13, 0
    %p159 = por %p157, %p158
    %p160 = scmp.ne.s32.totalorder %s152, %s154
    %p161 = scmp.eq.s32.totalorder %s18, 1
    %p162 = por %p160, %p161
    %p163 = scmp.ne.s32.totalorder %s154, %s155
    %p164 = scmp.eq.s32.totalorder %s18, 0
    %p165 = por %p163, %p164
    %p166 = scmp.ne.s32.totalorder %s154, %s155
    %p167 = scmp.eq.s32.totalorder %s19, 1
    %p168 = por %p166, %p167
    %p170 = scmp.ne.s32.totalorder %s155, %s169
    %p171 = scmp.eq.s32.totalorder %s19, 0
    %p172 = por %p170, %p171
    %s173 = ssub.s32 %s13, %s20
    %p174 = scmp.eq.s32.totalorder %s173, 0
    %s176 = sadd.s32 %s175, 1
    %s177 = scalar_select %p174, %s175, %s176
    %p180 = pneg %p174
    %p181 = scmp.eq.s32.totalorder %s13, 1
    %p182 = por %p180, %p181
    %p183 = scmp.ne.s32.totalorder %s175, %s178
    %p184 = scmp.eq.s32.totalorder %s13, 0
    %p185 = por %p183, %p184
    %p186 = scmp.ne.s32.totalorder %s175, %s178
    %p187 = scmp.eq.s32.totalorder %s18, 1
    %p188 = por %p186, %p187
    %p189 = scmp.ne.s32.totalorder %s178, %s179
    %p190 = scmp.eq.s32.totalorder %s18, 0
    %p191 = por %p189, %p190
    %p192 = scmp.ne.s32.totalorder %s178, %s179
    %p193 = scmp.eq.s32.totalorder %s19, 1
    %p194 = por %p192, %p193
    %p196 = scmp.ne.s32.totalorder %s179, %s195
    %p197 = scmp.eq.s32.totalorder %s19, 0
    %p198 = por %p196, %p197
    %p199 = scmp.le.s32.totalorder 1, %s13
    %p200 = scmp.lt.s32.totalorder %s13, 3
    %p201 = pnand %p199, %p200
    %p202 = pneg %p201
    // Predicated region
    $region9: #{mul_layer_net.1} parent=5 // pred_check
      _
    $region10: #{mul_layer_net.1} parent=5 // pred_check_branch
      %204 = sbr.rel (%p201) target = $region12
    $region11: #{mul_layer_net.1} parent=5 // pred_region
      %s205 = ssub.s32 %s13, 1
      // Predicated region
      $region13: #{mul_layer_net.1} parent=11 // pred_check
        %p206 = pneg %p60
      $region14: #{mul_layer_net.1} parent=11 // pred_check_branch
        %208 = sbr.rel (%p206) target = $region16
      $region15: #{mul_layer_net.1} parent=11 // pred_region
        _
      $region16: #{mul_layer_net.1} parent=11 // pred_fallthru
        _
      // Predicated region
      $region17: #{mul_layer_net.1} parent=11 // pred_check
        %p209 = pneg %p81
      $region18: #{mul_layer_net.1} parent=11 // pred_check_branch
        %211 = sbr.rel (%p209) target = $region20
      $region19: #{mul_layer_net.1} parent=11 // pred_region
        _
      $region20: #{mul_layer_net.1} parent=11 // pred_fallthru
        _
      // Predicated region
      $region21: #{mul_layer_net.1} parent=11 // pred_check
        %p212 = pneg %p102
      $region22: #{mul_layer_net.1} parent=11 // pred_check_branch
        %214 = sbr.rel (%p212) target = $region24
      $region23: #{mul_layer_net.1} parent=11 // pred_region
        _
      $region24: #{mul_layer_net.1} parent=11 // pred_fallthru
        _
      // Predicated region
      $region25: #{mul_layer_net.1} parent=11 // pred_check
        %p215 = pneg %p123
      $region26: #{mul_layer_net.1} parent=11 // pred_check_branch
        %217 = sbr.rel (%p215) target = $region28
      $region27: #{mul_layer_net.1} parent=11 // pred_region
        _
      $region28: #{mul_layer_net.1} parent=11 // pred_fallthru
        _
      // Predicated region
      $region29: #{mul_layer_net.1} parent=11 // pred_check
        %p218 = pneg %p144
      $region30: #{mul_layer_net.1} parent=11 // pred_check_branch
        %220 = sbr.rel (%p218) target = $region32
      $region31: #{mul_layer_net.1} parent=11 // pred_region
        _
      $region32: #{mul_layer_net.1} parent=11 // pred_fallthru
        _
      // Predicated region
      $region33: #{mul_layer_net.1} parent=11 // pred_check
        %p221 = pneg %p165
      $region34: #{mul_layer_net.1} parent=11 // pred_check_branch
        %223 = sbr.rel (%p221) target = $region36
      $region35: #{mul_layer_net.1} parent=11 // pred_region
        _
      $region36: #{mul_layer_net.1} parent=11 // pred_fallthru
        _
    $region12: #{mul_layer_net.1} parent=5 // pred_fallthru
      _
    %p224 = scmp.lt.s32.totalorder %s13, 2
    // Predicated region
    $region37: #{mul_layer_net.1} parent=5 // pred_check
      %p225 = pneg %p224
    $region38: #{mul_layer_net.1} parent=5 // pred_check_branch
      %227 = sbr.rel (%p225) target = $region40
    $region39: #{mul_layer_net.1} parent=5 // pred_region
      // Predicated region
      $region41: #{mul_layer_net.1} parent=39 // pred_check
        %p228 = pneg %p33
      $region42: #{mul_layer_net.1} parent=39 // pred_check_branch
        %230 = sbr.rel (%p228) target = $region44
      $region43: #{mul_layer_net.1} parent=39 // pred_region
        %s231 = smul.u32 16, %s13
        %p232 = scmp.lt.s32.totalorder %s231, 31
        %s233 = scalar_select %p232, %s231, 31
        %s234 = smul.addr %s233, 8
        %s235 = scalar_lea.vmem %s0, %s234
        %s236 = smul.u32 16, %s13
      $region44: #{mul_layer_net.1} parent=39 // pred_fallthru
        _
    $region40: #{mul_layer_net.1} parent=5 // pred_fallthru
      _
    %p237 = scmp.le.s32.totalorder 1, %s13
    %p238 = scmp.lt.s32.totalorder %s13, 3
    %p239 = pnand %p237, %p238
    %p240 = pneg %p239
    // Predicated region
    $region45: #{mul_layer_net.1} parent=5 // pred_check
      _
    $region46: #{mul_layer_net.1} parent=5 // pred_check_branch
      %242 = sbr.rel (%p239) target = $region48
    $region47: #{mul_layer_net.1} parent=5 // pred_region
      %s243 = ssub.s32 %s13, 1
      %s244 = smul.u32 16, %s18
      %p245 = scmp.lt.s32.totalorder %s244, 31
      %s246 = scalar_select %p245, %s244, 31
      %s247 = smul.addr %s246, 8
      %s248 = scalar_lea.vmem %s0, %s247
      %p249 = pneg %p39
      %p250 = pneg %p36
      %p251 = pneg %p60
      %p252 = pneg %p57
      %p253 = pneg %p81
      %p254 = pneg %p78
      %p255 = pneg %p102
      %p256 = pneg %p99
      %p257 = pneg %p123
      %p258 = pneg %p120
      %p259 = pneg %p144
      %p260 = pneg %p141
      %p261 = pneg %p165
      %p262 = pneg %p162
      %p263 = pneg %p191
      %p264 = pneg %p188
      %s265 = smul.u32 16, %s18
      %p266 = scmp.lt.s32.totalorder %s265, 31
      %s267 = scalar_select %p266, %s265, 31
      %s268 = smul.addr %s267, 8
      %s269 = scalar_lea.vmem %s7, %s268
      %s270 = smul.u32 16, %s18
      %p271 = scmp.lt.s32.totalorder %s270, 31
      %s272 = scalar_select %p271, %s270, 31
      %s273 = smul.addr %s272, 8
      %s274 = scalar_lea.vmem %s0, %s273
      %s275 = smul.u32 16, %s18
      %s276 = smul.u32 16, %s18
      %p277 = scmp.lt.s32.totalorder %s276, 31
      %s278 = scalar_select %p277, %s276, 31
      %s279 = smul.addr %s278, 8
      %s280 = scalar_lea.vmem %s7, %s279
      %s281 = smul.u32 16, %s18
      %v283 = vld [vmem:[%s274] sm:$0xff]
      %v284 = vld [vmem:[%s274 + $0x8] sm:$0xff]
      %v285 = vld [vmem:[%s274 + $0x10] sm:$0xff]
      %v286 = vld [vmem:[%s274 + $0x18] sm:$0xff]
      %v287 = vld [vmem:[%s274 + $0x20] sm:$0xff]
      %v288 = vld [vmem:[%s274 + $0x28] sm:$0xff]
      %v289 = vld [vmem:[%s274 + $0x30] sm:$0xff]
      %v290 = vld [vmem:[%s274 + $0x38] sm:$0xff]
      %v291 = vld [vmem:[%s274 + $0x40] sm:$0xff]
      %v292 = vld [vmem:[%s274 + $0x48] sm:$0xff]
      %v293 = vld [vmem:[%s274 + $0x50] sm:$0xff]
      %v294 = vld [vmem:[%s274 + $0x58] sm:$0xff]
      %v295 = vld [vmem:[%s274 + $0x60] sm:$0xff]
      %v296 = vld [vmem:[%s274 + $0x68] sm:$0xff]
      %v297 = vld [vmem:[%s274 + $0x70] sm:$0xff]
      %v298 = vld [vmem:[%s274 + $0x78] sm:$0xff]
      %v299 = vld [vmem:[%s1] sm:$0x3]
      %v300 = vld [vmem:[%s2] sm:$0x1]
      %302 = vset.pattern.permute.xlu0 0
      %303 = vperm.xlu0 %302, %v283
      %v304 = vpop.permute.xlu0 %303
      %307 = vset.pattern.permute.xlu0 0
      %308 = vperm.xlu0 %307, %v284
      %v309 = vpop.permute.xlu0 %308
      %312 = vset.pattern.permute.xlu0 0
      %313 = vperm.xlu0 %312, %v285
      %v314 = vpop.permute.xlu0 %313
      %317 = vset.pattern.permute.xlu0 0
      %318 = vperm.xlu0 %317, %v286
      %v319 = vpop.permute.xlu0 %318
      %322 = vset.pattern.permute.xlu0 0
      %323 = vperm.xlu0 %322, %v287
      %v324 = vpop.permute.xlu0 %323
      %327 = vset.pattern.permute.xlu0 0
      %328 = vperm.xlu0 %327, %v288
      %v329 = vpop.permute.xlu0 %328
      %332 = vset.pattern.permute.xlu0 0
      %333 = vperm.xlu0 %332, %v289
      %v334 = vpop.permute.xlu0 %333
      %337 = vset.pattern.permute.xlu0 0
      %338 = vperm.xlu0 %337, %v290
      %v339 = vpop.permute.xlu0 %338
      %342 = vset.pattern.permute.xlu0 0
      %343 = vperm.xlu0 %342, %v291
      %v344 = vpop.permute.xlu0 %343
      %347 = vset.pattern.permute.xlu0 0
      %348 = vperm.xlu0 %347, %v292
      %v349 = vpop.permute.xlu0 %348
      %352 = vset.pattern.permute.xlu0 0
      %353 = vperm.xlu0 %352, %v293
      %v354 = vpop.permute.xlu0 %353
      %357 = vset.pattern.permute.xlu0 0
      %358 = vperm.xlu0 %357, %v294
      %v359 = vpop.permute.xlu0 %358
      %362 = vset.pattern.permute.xlu0 0
      %363 = vperm.xlu0 %362, %v295
      %v364 = vpop.permute.xlu0 %363
      %367 = vset.pattern.permute.xlu0 0
      %368 = vperm.xlu0 %367, %v296
      %v369 = vpop.permute.xlu0 %368
      %372 = vset.pattern.permute.xlu0 0
      %373 = vperm.xlu0 %372, %v297
      %v374 = vpop.permute.xlu0 %373
      %377 = vset.pattern.permute.xlu0 0
      %378 = vperm.xlu0 %377, %v298
      %v379 = vpop.permute.xlu0 %378
      %v381 = vlaneseq
      %v382 = vshrl.u32 %v381, 7
      %v383 = vsub.s32 0, %v382
      %v384 = vrot.slane %v299, %v383
      %v385 = vmul.f32 %v304, %v384
      %v386 = vmul.f32 %v309, %v384
      %v387 = vmul.f32 %v314, %v384
      %v388 = vmul.f32 %v319, %v384
      %v389 = vmul.f32 %v324, %v384
      %v390 = vmul.f32 %v329, %v384
      %v391 = vmul.f32 %v334, %v384
      %v392 = vmul.f32 %v339, %v384
      %v393 = vmul.f32 %v344, %v384
      %v394 = vmul.f32 %v349, %v384
      %v395 = vmul.f32 %v354, %v384
      %v396 = vmul.f32 %v359, %v384
      %v397 = vmul.f32 %v364, %v384
      %v398 = vmul.f32 %v369, %v384
      %v399 = vmul.f32 %v374, %v384
      %v400 = vmul.f32 %v379, %v384
      %v402 = vlaneseq
      %v403 = vshrl.u32 %v402, 7
      %v404 = vsub.s32 0, %v403
      %v405 = vrot.slane %v300, %v404
      %v407 = vadd.f32 %v405, %v385
      %v408 = vadd.f32 %v405, %v386
      %v409 = vadd.f32 %v405, %v387
      %v410 = vadd.f32 %v405, %v388
      %v411 = vadd.f32 %v405, %v389
      %v412 = vadd.f32 %v405, %v390
      %v413 = vadd.f32 %v405, %v391
      %v414 = vadd.f32 %v405, %v392
      %v415 = vadd.f32 %v405, %v393
      %v416 = vadd.f32 %v405, %v394
      %v417 = vadd.f32 %v405, %v395
      %v418 = vadd.f32 %v405, %v396
      %v419 = vadd.f32 %v405, %v397
      %v420 = vadd.f32 %v405, %v398
      %v421 = vadd.f32 %v405, %v399
      %v422 = vadd.f32 %v405, %v400
      %423 = vset.pattern.permute.xlu0 1
      %424 = vperm.xlu0 %423, %v283
      %v425 = vpop.permute.xlu0 %424
      %427 = vset.pattern.permute.xlu0 1
      %428 = vperm.xlu0 %427, %v284
      %v429 = vpop.permute.xlu0 %428
      %431 = vset.pattern.permute.xlu0 1
      %432 = vperm.xlu0 %431, %v285
      %v433 = vpop.permute.xlu0 %432
      %435 = vset.pattern.permute.xlu0 1
      %436 = vperm.xlu0 %435, %v286
      %v437 = vpop.permute.xlu0 %436
      %439 = vset.pattern.permute.xlu0 1
      %440 = vperm.xlu0 %439, %v287
      %v441 = vpop.permute.xlu0 %440
      %443 = vset.pattern.permute.xlu0 1
      %444 = vperm.xlu0 %443, %v288
      %v445 = vpop.permute.xlu0 %444
      %447 = vset.pattern.permute.xlu0 1
      %448 = vperm.xlu0 %447, %v289
      %v449 = vpop.permute.xlu0 %448
      %451 = vset.pattern.permute.xlu0 1
      %452 = vperm.xlu0 %451, %v290
      %v453 = vpop.permute.xlu0 %452
      %455 = vset.pattern.permute.xlu0 1
      %456 = vperm.xlu0 %455, %v291
      %v457 = vpop.permute.xlu0 %456
      %459 = vset.pattern.permute.xlu0 1
      %460 = vperm.xlu0 %459, %v292
      %v461 = vpop.permute.xlu0 %460
      %463 = vset.pattern.permute.xlu0 1
      %464 = vperm.xlu0 %463, %v293
      %v465 = vpop.permute.xlu0 %464
      %467 = vset.pattern.permute.xlu0 1
      %468 = vperm.xlu0 %467, %v294
      %v469 = vpop.permute.xlu0 %468
      %471 = vset.pattern.permute.xlu0 1
      %472 = vperm.xlu0 %471, %v295
      %v473 = vpop.permute.xlu0 %472
      %475 = vset.pattern.permute.xlu0 1
      %476 = vperm.xlu0 %475, %v296
      %v477 = vpop.permute.xlu0 %476
      %479 = vset.pattern.permute.xlu0 1
      %480 = vperm.xlu0 %479, %v297
      %v481 = vpop.permute.xlu0 %480
      %483 = vset.pattern.permute.xlu0 1
      %484 = vperm.xlu0 %483, %v298
      %v485 = vpop.permute.xlu0 %484
      %v487 = vlaneseq
      %v488 = vshrl.u32 %v487, 7
      %v489 = vsub.s32 1, %v488
      %v490 = vrot.slane %v299, %v489
      %v491 = vmul.f32 %v425, %v490
      %v492 = vmul.f32 %v429, %v490
      %v493 = vmul.f32 %v433, %v490
      %v494 = vmul.f32 %v437, %v490
      %v495 = vmul.f32 %v441, %v490
      %v496 = vmul.f32 %v445, %v490
      %v497 = vmul.f32 %v449, %v490
      %v498 = vmul.f32 %v453, %v490
      %v499 = vmul.f32 %v457, %v490
      %v500 = vmul.f32 %v461, %v490
      %v501 = vmul.f32 %v465, %v490
      %v502 = vmul.f32 %v469, %v490
      %v503 = vmul.f32 %v473, %v490
      %v504 = vmul.f32 %v477, %v490
      %v505 = vmul.f32 %v481, %v490
      %v506 = vmul.f32 %v485, %v490
      %v507 = vadd.f32 %v407, %v491
      %v508 = vadd.f32 %v408, %v492
      %v509 = vadd.f32 %v409, %v493
      %v510 = vadd.f32 %v410, %v494
      %v511 = vadd.f32 %v411, %v495
      %v512 = vadd.f32 %v412, %v496
      %v513 = vadd.f32 %v413, %v497
      %v514 = vadd.f32 %v414, %v498
      %v515 = vadd.f32 %v415, %v499
      %v516 = vadd.f32 %v416, %v500
      %v517 = vadd.f32 %v417, %v501
      %v518 = vadd.f32 %v418, %v502
      %v519 = vadd.f32 %v419, %v503
      %v520 = vadd.f32 %v420, %v504
      %v521 = vadd.f32 %v421, %v505
      %v522 = vadd.f32 %v422, %v506
      %v523 = vtanh.pop %v507
      %v524 = vtanh.pop %v508
      %v525 = vtanh.pop %v509
      %v526 = vtanh.pop %v510
      %v527 = vtanh.pop %v511
      %v528 = vtanh.pop %v512
      %v529 = vtanh.pop %v513
      %v530 = vtanh.pop %v514
      %v531 = vtanh.pop %v515
      %v532 = vtanh.pop %v516
      %v533 = vtanh.pop %v517
      %v534 = vtanh.pop %v518
      %v535 = vtanh.pop %v519
      %v536 = vtanh.pop %v520
      %v537 = vtanh.pop %v521
      %v538 = vtanh.pop %v522
      %v539 = vld [vmem:[%s3] sm:$0xff]
      %v540 = vld [vmem:[%s3 + $0x8] sm:$0xff]
      %v541 = vld [vmem:[%s3 + $0x10] sm:$0xff]
      %v542 = vld [vmem:[%s3 + $0x18] sm:$0xff]
      %v543 = vpack.c.bf16 %v540, %v539
      %v544 = vpack.c.bf16 %v542, %v541
      %v545 = vld [vmem:[%s4] sm:$0x1]
      %v546 = vpack.c.bf16 %v524, %v523
      %v547 = vpack.c.bf16 %v526, %v525
      %v548 = vpack.c.bf16 %v528, %v527
      %v549 = vpack.c.bf16 %v530, %v529
      %v550 = vpack.c.bf16 %v532, %v531
      %v551 = vpack.c.bf16 %v534, %v533
      %v552 = vpack.c.bf16 %v536, %v535
      %v553 = vpack.c.bf16 %v538, %v537
      %v555 = vlaneseq
      %v556 = vshrl.u32 %v555, 7
      %v557 = vsub.s32 0, %v556
      %v558 = vrot.slane %v545, %v557
      %vm560 = vcmask 261120
      %v562 = vsel %vm560, %v546, 0
      %v565 = vsel %vm560, %v547, 0
      %v568 = vsel %vm560, %v548, 0
      %v571 = vsel %vm560, %v549, 0
      %v574 = vsel %vm560, %v550, 0
      %v577 = vsel %vm560, %v551, 0
      %v580 = vsel %vm560, %v552, 0
      %v583 = vsel %vm560, %v553, 0
      %585 = vmatprep.subr.bf16.mxu0 0
      %586 = vmatpush1.bf16.msra.mxu0 0
      %587 = vmatprep.subr.bf16.mxu0 0
      %588 = vmatpush1.bf16.msra.mxu0 0
      %589 = vmatprep.subr.bf16.mxu0 0
      %590 = vmatpush1.bf16.msra.mxu0 0
      %591 = vmatprep.subr.bf16.mxu0 0
      %592 = vmatpush1.bf16.msra.mxu0 0
      %593 = vmatprep.subr.bf16.mxu0 0
      %594 = vmatpush1.bf16.msra.mxu0 0
      %595 = vmatprep.subr.bf16.mxu0 0
      %596 = vmatpush1.bf16.msra.mxu0 0
      %597 = vmatprep.subr.bf16.mxu0 0
      %598 = vmatpush1.bf16.msra.mxu0 %v544
      %599 = vmatprep.subr.bf16.mxu0 0
      %600 = vmatpush1.bf16.msra.mxu0 %v543
      %601 = vmatprep.subr.bf16.mxu0 0
      %602 = vmatpush2.bf16.msra.mxu0 0
      %603 = vmatprep.subr.bf16.mxu0 0
      %604 = vmatpush2.bf16.msra.mxu0 0
      %605 = vmatprep.subr.bf16.mxu0 0
      %606 = vmatpush2.bf16.msra.mxu0 0
      %607 = vmatprep.subr.bf16.mxu0 0
      %608 = vmatpush2.bf16.msra.mxu0 0
      %609 = vmatprep.subr.bf16.mxu0 0
      %610 = vmatpush2.bf16.msra.mxu0 0
      %611 = vmatprep.subr.bf16.mxu0 0
      %612 = vmatpush2.bf16.msra.mxu0 0
      %613 = vmatprep.subr.bf16.mxu0 0
      %614 = vmatpush2.bf16.msra.mxu0 0
      %615 = vmatprep.subr.bf16.mxu0 0
      %616 = vmatpush2.bf16.msra.mxu0 0
      %617 = vmatprep.mubr.bf16.mxu0 0
      %618 = vmatmul.mubr.bf16.gmra.mxu0 %v562
      %v619 = vpop.f32.mrf.mxu0
      %v620 = vadd.f32 %v558, %v619
      %v621 = vpop.f32.mrf.mxu0
      %v622 = vpop.f32.mrf.mxu0
      %v623 = vadd.f32 %v558, %v622
      %v624 = vpop.f32.mrf.mxu0
      %625 = vmatprep.mubr.bf16.mxu0 0
      %626 = vmatmul.mubr.bf16.gmra.mxu0 %v565
      %v627 = vpop.f32.mrf.mxu0
      %v628 = vadd.f32 %v558, %v627
      %v629 = vpop.f32.mrf.mxu0
      %v630 = vpop.f32.mrf.mxu0
      %v631 = vadd.f32 %v558, %v630
      %v632 = vpop.f32.mrf.mxu0
      %633 = vmatprep.mubr.bf16.mxu0 0
      %634 = vmatmul.mubr.bf16.gmra.mxu0 %v568
      %v635 = vpop.f32.mrf.mxu0
      %v636 = vadd.f32 %v558, %v635
      %v637 = vpop.f32.mrf.mxu0
      %v638 = vpop.f32.mrf.mxu0
      %v639 = vadd.f32 %v558, %v638
      %v640 = vpop.f32.mrf.mxu0
      %641 = vmatprep.mubr.bf16.mxu0 0
      %642 = vmatmul.mubr.bf16.gmra.mxu0 %v571
      %v643 = vpop.f32.mrf.mxu0
      %v644 = vadd.f32 %v558, %v643
      %v645 = vpop.f32.mrf.mxu0
      %v646 = vpop.f32.mrf.mxu0
      %v647 = vadd.f32 %v558, %v646
      %v648 = vpop.f32.mrf.mxu0
      %649 = vmatprep.mubr.bf16.mxu0 0
      %650 = vmatmul.mubr.bf16.gmra.mxu0 %v574
      %v651 = vpop.f32.mrf.mxu0
      %v652 = vadd.f32 %v558, %v651
      %v653 = vpop.f32.mrf.mxu0
      %v654 = vpop.f32.mrf.mxu0
      %v655 = vadd.f32 %v558, %v654
      %v656 = vpop.f32.mrf.mxu0
      %657 = vmatprep.mubr.bf16.mxu0 0
      %658 = vmatmul.mubr.bf16.gmra.mxu0 %v577
      %v659 = vpop.f32.mrf.mxu0
      %v660 = vadd.f32 %v558, %v659
      %v661 = vpop.f32.mrf.mxu0
      %v662 = vpop.f32.mrf.mxu0
      %v663 = vadd.f32 %v558, %v662
      %v664 = vpop.f32.mrf.mxu0
      %665 = vmatprep.mubr.bf16.mxu0 0
      %666 = vmatmul.mubr.bf16.gmra.mxu0 %v580
      %v667 = vpop.f32.mrf.mxu0
      %v668 = vadd.f32 %v558, %v667
      %v669 = vpop.f32.mrf.mxu0
      %v670 = vpop.f32.mrf.mxu0
      %v671 = vadd.f32 %v558, %v670
      %v672 = vpop.f32.mrf.mxu0
      %673 = vmatprep.mubr.bf16.mxu0 0
      %674 = vmatmul.mubr.bf16.gmra.mxu0 %v583
      %v675 = vpop.f32.mrf.mxu0
      %v676 = vadd.f32 %v558, %v675
      %v677 = vpop.f32.mrf.mxu0
      %v678 = vpop.f32.mrf.mxu0
      %v679 = vadd.f32 %v558, %v678
      %v680 = vpop.f32.mrf.mxu0
      %681 = vdwg.mxu0
      %v682 = vtanh.pop %v620
      %v683 = vtanh.pop %v623
      %v684 = vtanh.pop %v628
      %v685 = vtanh.pop %v631
      %v686 = vtanh.pop %v636
      %v687 = vtanh.pop %v639
      %v688 = vtanh.pop %v644
      %v689 = vtanh.pop %v647
      %v690 = vtanh.pop %v652
      %v691 = vtanh.pop %v655
      %v692 = vtanh.pop %v660
      %v693 = vtanh.pop %v663
      %v694 = vtanh.pop %v668
      %v695 = vtanh.pop %v671
      %v696 = vtanh.pop %v676
      %v697 = vtanh.pop %v679
      %s698 = scalar_lea.vmem %s3, 32
      %v699 = vld [vmem:[%s698] sm:$0xff]
      %v700 = vld [vmem:[%s698 + $0x8] sm:$0xff]
      %v701 = vld [vmem:[%s698 + $0x10] sm:$0xff]
      %v702 = vld [vmem:[%s698 + $0x18] sm:$0xff]
      %v703 = vpack.c.bf16 %v700, %v699
      %v704 = vpack.c.bf16 %v702, %v701
      %s705 = scalar_lea.vmem %s4, 1
      %v706 = vld [vmem:[%s705] sm:$0x1]
      %v707 = vpack.c.bf16 %v683, %v682
      %v708 = vpack.c.bf16 %v685, %v684
      %v709 = vpack.c.bf16 %v687, %v686
      %v710 = vpack.c.bf16 %v689, %v688
      %v711 = vpack.c.bf16 %v691, %v690
      %v712 = vpack.c.bf16 %v693, %v692
      %v713 = vpack.c.bf16 %v695, %v694
      %v714 = vpack.c.bf16 %v697, %v696
      %v716 = vlaneseq
      %v717 = vshrl.u32 %v716, 7
      %v718 = vsub.s32 0, %v717
      %v719 = vrot.slane %v706, %v718
      %v722 = vsel %vm560, %v707, 0
      %v725 = vsel %vm560, %v708, 0
      %v728 = vsel %vm560, %v709, 0
      %v731 = vsel %vm560, %v710, 0
      %v734 = vsel %vm560, %v711, 0
      %v737 = vsel %vm560, %v712, 0
      %v740 = vsel %vm560, %v713, 0
      %v743 = vsel %vm560, %v714, 0
      %745 = vmatprep.subr.bf16.mxu0 0
      %746 = vmatpush1.bf16.msra.mxu0 0
      %747 = vmatprep.subr.bf16.mxu0 0
      %748 = vmatpush1.bf16.msra.mxu0 0
      %749 = vmatprep.subr.bf16.mxu0 0
      %750 = vmatpush1.bf16.msra.mxu0 0
      %751 = vmatprep.subr.bf16.mxu0 0
      %752 = vmatpush1.bf16.msra.mxu0 0
      %753 = vmatprep.subr.bf16.mxu0 0
      %754 = vmatpush1.bf16.msra.mxu0 0
      %755 = vmatprep.subr.bf16.mxu0 0
      %756 = vmatpush1.bf16.msra.mxu0 0
      %757 = vmatprep.subr.bf16.mxu0 0
      %758 = vmatpush1.bf16.msra.mxu0 %v704
      %759 = vmatprep.subr.bf16.mxu0 0
      %760 = vmatpush1.bf16.msra.mxu0 %v703
      %761 = vmatprep.subr.bf16.mxu0 0
      %762 = vmatpush2.bf16.msra.mxu0 0
      %763 = vmatprep.subr.bf16.mxu0 0
      %764 = vmatpush2.bf16.msra.mxu0 0
      %765 = vmatprep.subr.bf16.mxu0 0
      %766 = vmatpush2.bf16.msra.mxu0 0
      %767 = vmatprep.subr.bf16.mxu0 0
      %768 = vmatpush2.bf16.msra.mxu0 0
      %769 = vmatprep.subr.bf16.mxu0 0
      %770 = vmatpush2.bf16.msra.mxu0 0
      %771 = vmatprep.subr.bf16.mxu0 0
      %772 = vmatpush2.bf16.msra.mxu0 0
      %773 = vmatprep.subr.bf16.mxu0 0
      %774 = vmatpush2.bf16.msra.mxu0 0
      %775 = vmatprep.subr.bf16.mxu0 0
      %776 = vmatpush2.bf16.msra.mxu0 0
      %777 = vmatprep.mubr.bf16.mxu0 0
      %778 = vmatmul.mubr.bf16.gmra.mxu0 %v722
      %v779 = vpop.f32.mrf.mxu0
      %v780 = vadd.f32 %v719, %v779
      %v781 = vpop.f32.mrf.mxu0
      %v782 = vpop.f32.mrf.mxu0
      %v783 = vadd.f32 %v719, %v782
      %v784 = vpop.f32.mrf.mxu0
      %785 = vmatprep.mubr.bf16.mxu0 0
      %786 = vmatmul.mubr.bf16.gmra.mxu0 %v725
      %v787 = vpop.f32.mrf.mxu0
      %v788 = vadd.f32 %v719, %v787
      %v789 = vpop.f32.mrf.mxu0
      %v790 = vpop.f32.mrf.mxu0
      %v791 = vadd.f32 %v719, %v790
      %v792 = vpop.f32.mrf.mxu0
      %793 = vmatprep.mubr.bf16.mxu0 0
      %794 = vmatmul.mubr.bf16.gmra.mxu0 %v728
      %v795 = vpop.f32.mrf.mxu0
      %v796 = vadd.f32 %v719, %v795
      %v797 = vpop.f32.mrf.mxu0
      %v798 = vpop.f32.mrf.mxu0
      %v799 = vadd.f32 %v719, %v798
      %v800 = vpop.f32.mrf.mxu0
      %801 = vmatprep.mubr.bf16.mxu0 0
      %802 = vmatmul.mubr.bf16.gmra.mxu0 %v731
      %v803 = vpop.f32.mrf.mxu0
      %v804 = vadd.f32 %v719, %v803
      %v805 = vpop.f32.mrf.mxu0
      %v806 = vpop.f32.mrf.mxu0
      %v807 = vadd.f32 %v719, %v806
      %v808 = vpop.f32.mrf.mxu0
      %809 = vmatprep.mubr.bf16.mxu0 0
      %810 = vmatmul.mubr.bf16.gmra.mxu0 %v734
      %v811 = vpop.f32.mrf.mxu0
      %v812 = vadd.f32 %v719, %v811
      %v813 = vpop.f32.mrf.mxu0
      %v814 = vpop.f32.mrf.mxu0
      %v815 = vadd.f32 %v719, %v814
      %v816 = vpop.f32.mrf.mxu0
      %817 = vmatprep.mubr.bf16.mxu0 0
      %818 = vmatmul.mubr.bf16.gmra.mxu0 %v737
      %v819 = vpop.f32.mrf.mxu0
      %v820 = vadd.f32 %v719, %v819
      %v821 = vpop.f32.mrf.mxu0
      %v822 = vpop.f32.mrf.mxu0
      %v823 = vadd.f32 %v719, %v822
      %v824 = vpop.f32.mrf.mxu0
      %825 = vmatprep.mubr.bf16.mxu0 0
      %826 = vmatmul.mubr.bf16.gmra.mxu0 %v740
      %v827 = vpop.f32.mrf.mxu0
      %v828 = vadd.f32 %v719, %v827
      %v829 = vpop.f32.mrf.mxu0
      %v830 = vpop.f32.mrf.mxu0
      %v831 = vadd.f32 %v719, %v830
      %v832 = vpop.f32.mrf.mxu0
      %833 = vmatprep.mubr.bf16.mxu0 0
      %834 = vmatmul.mubr.bf16.gmra.mxu0 %v743
      %v835 = vpop.f32.mrf.mxu0
      %v836 = vadd.f32 %v719, %v835
      %v837 = vpop.f32.mrf.mxu0
      %v838 = vpop.f32.mrf.mxu0
      %v839 = vadd.f32 %v719, %v838
      %v840 = vpop.f32.mrf.mxu0
      %841 = vdwg.mxu0
      %v842 = vtanh.pop %v780
      %v843 = vtanh.pop %v783
      %v844 = vtanh.pop %v788
      %v845 = vtanh.pop %v791
      %v846 = vtanh.pop %v796
      %v847 = vtanh.pop %v799
      %v848 = vtanh.pop %v804
      %v849 = vtanh.pop %v807
      %v850 = vtanh.pop %v812
      %v851 = vtanh.pop %v815
      %v852 = vtanh.pop %v820
      %v853 = vtanh.pop %v823
      %v854 = vtanh.pop %v828
      %v855 = vtanh.pop %v831
      %v856 = vtanh.pop %v836
      %v857 = vtanh.pop %v839
      %s858 = scalar_lea.vmem %s3, 64
      %v859 = vld [vmem:[%s858] sm:$0xff]
      %v860 = vld [vmem:[%s858 + $0x8] sm:$0xff]
      %v861 = vld [vmem:[%s858 + $0x10] sm:$0xff]
      %v862 = vld [vmem:[%s858 + $0x18] sm:$0xff]
      %v863 = vpack.c.bf16 %v860, %v859
      %v864 = vpack.c.bf16 %v862, %v861
      %s865 = scalar_lea.vmem %s4, 2
      %v866 = vld [vmem:[%s865] sm:$0x1]
      %v867 = vpack.c.bf16 %v843, %v842
      %v868 = vpack.c.bf16 %v845, %v844
      %v869 = vpack.c.bf16 %v847, %v846
      %v870 = vpack.c.bf16 %v849, %v848
      %v871 = vpack.c.bf16 %v851, %v850
      %v872 = vpack.c.bf16 %v853, %v852
      %v873 = vpack.c.bf16 %v855, %v854
      %v874 = vpack.c.bf16 %v857, %v856
      %v876 = vlaneseq
      %v877 = vshrl.u32 %v876, 7
      %v878 = vsub.s32 0, %v877
      %v879 = vrot.slane %v866, %v878
      %v882 = vsel %vm560, %v867, 0
      %v885 = vsel %vm560, %v868, 0
      %v888 = vsel %vm560, %v869, 0
      %v891 = vsel %vm560, %v870, 0
      %v894 = vsel %vm560, %v871, 0
      %v897 = vsel %vm560, %v872, 0
      %v900 = vsel %vm560, %v873, 0
      %v903 = vsel %vm560, %v874, 0
      %905 = vmatprep.subr.bf16.mxu0 0
      %906 = vmatpush1.bf16.msra.mxu0 0
      %907 = vmatprep.subr.bf16.mxu0 0
      %908 = vmatpush1.bf16.msra.mxu0 0
      %909 = vmatprep.subr.bf16.mxu0 0
      %910 = vmatpush1.bf16.msra.mxu0 0
      %911 = vmatprep.subr.bf16.mxu0 0
      %912 = vmatpush1.bf16.msra.mxu0 0
      %913 = vmatprep.subr.bf16.mxu0 0
      %914 = vmatpush1.bf16.msra.mxu0 0
      %915 = vmatprep.subr.bf16.mxu0 0
      %916 = vmatpush1.bf16.msra.mxu0 0
      %917 = vmatprep.subr.bf16.mxu0 0
      %918 = vmatpush1.bf16.msra.mxu0 %v864
      %919 = vmatprep.subr.bf16.mxu0 0
      %920 = vmatpush1.bf16.msra.mxu0 %v863
      %921 = vmatprep.subr.bf16.mxu0 0
      %922 = vmatpush2.bf16.msra.mxu0 0
      %923 = vmatprep.subr.bf16.mxu0 0
      %924 = vmatpush2.bf16.msra.mxu0 0
      %925 = vmatprep.subr.bf16.mxu0 0
      %926 = vmatpush2.bf16.msra.mxu0 0
      %927 = vmatprep.subr.bf16.mxu0 0
      %928 = vmatpush2.bf16.msra.mxu0 0
      %929 = vmatprep.subr.bf16.mxu0 0
      %930 = vmatpush2.bf16.msra.mxu0 0
      %931 = vmatprep.subr.bf16.mxu0 0
      %932 = vmatpush2.bf16.msra.mxu0 0
      %933 = vmatprep.subr.bf16.mxu0 0
      %934 = vmatpush2.bf16.msra.mxu0 0
      %935 = vmatprep.subr.bf16.mxu0 0
      %936 = vmatpush2.bf16.msra.mxu0 0
      %937 = vmatprep.mubr.bf16.mxu0 0
      %938 = vmatmul.mubr.bf16.gmra.mxu0 %v882
      %v939 = vpop.f32.mrf.mxu0
      %v940 = vadd.f32 %v879, %v939
      %v941 = vpop.f32.mrf.mxu0
      %v942 = vpop.f32.mrf.mxu0
      %v943 = vadd.f32 %v879, %v942
      %v944 = vpop.f32.mrf.mxu0
      %945 = vmatprep.mubr.bf16.mxu0 0
      %946 = vmatmul.mubr.bf16.gmra.mxu0 %v885
      %v947 = vpop.f32.mrf.mxu0
      %v948 = vadd.f32 %v879, %v947
      %v949 = vpop.f32.mrf.mxu0
      %v950 = vpop.f32.mrf.mxu0
      %v951 = vadd.f32 %v879, %v950
      %v952 = vpop.f32.mrf.mxu0
      %953 = vmatprep.mubr.bf16.mxu0 0
      %954 = vmatmul.mubr.bf16.gmra.mxu0 %v888
      %v955 = vpop.f32.mrf.mxu0
      %v956 = vadd.f32 %v879, %v955
      %v957 = vpop.f32.mrf.mxu0
      %v958 = vpop.f32.mrf.mxu0
      %v959 = vadd.f32 %v879, %v958
      %v960 = vpop.f32.mrf.mxu0
      %961 = vmatprep.mubr.bf16.mxu0 0
      %962 = vmatmul.mubr.bf16.gmra.mxu0 %v891
      %v963 = vpop.f32.mrf.mxu0
      %v964 = vadd.f32 %v879, %v963
      %v965 = vpop.f32.mrf.mxu0
      %v966 = vpop.f32.mrf.mxu0
      %v967 = vadd.f32 %v879, %v966
      %v968 = vpop.f32.mrf.mxu0
      %969 = vmatprep.mubr.bf16.mxu0 0
      %970 = vmatmul.mubr.bf16.gmra.mxu0 %v894
      %v971 = vpop.f32.mrf.mxu0
      %v972 = vadd.f32 %v879, %v971
      %v973 = vpop.f32.mrf.mxu0
      %v974 = vpop.f32.mrf.mxu0
      %v975 = vadd.f32 %v879, %v974
      %v976 = vpop.f32.mrf.mxu0
      %977 = vmatprep.mubr.bf16.mxu0 0
      %978 = vmatmul.mubr.bf16.gmra.mxu0 %v897
      %v979 = vpop.f32.mrf.mxu0
      %v980 = vadd.f32 %v879, %v979
      %v981 = vpop.f32.mrf.mxu0
      %v982 = vpop.f32.mrf.mxu0
      %v983 = vadd.f32 %v879, %v982
      %v984 = vpop.f32.mrf.mxu0
      %985 = vmatprep.mubr.bf16.mxu0 0
      %986 = vmatmul.mubr.bf16.gmra.mxu0 %v900
      %v987 = vpop.f32.mrf.mxu0
      %v988 = vadd.f32 %v879, %v987
      %v989 = vpop.f32.mrf.mxu0
      %v990 = vpop.f32.mrf.mxu0
      %v991 = vadd.f32 %v879, %v990
      %v992 = vpop.f32.mrf.mxu0
      %993 = vmatprep.mubr.bf16.mxu0 0
      %994 = vmatmul.mubr.bf16.gmra.mxu0 %v903
      %v995 = vpop.f32.mrf.mxu0
      %v996 = vadd.f32 %v879, %v995
      %v997 = vpop.f32.mrf.mxu0
      %v998 = vpop.f32.mrf.mxu0
      %v999 = vadd.f32 %v879, %v998
      %v1000 = vpop.f32.mrf.mxu0
      %1001 = vdwg.mxu0
      %v1002 = vtanh.pop %v940
      %v1003 = vtanh.pop %v943
      %v1004 = vtanh.pop %v948
      %v1005 = vtanh.pop %v951
      %v1006 = vtanh.pop %v956
      %v1007 = vtanh.pop %v959
      %v1008 = vtanh.pop %v964
      %v1009 = vtanh.pop %v967
      %v1010 = vtanh.pop %v972
      %v1011 = vtanh.pop %v975
      %v1012 = vtanh.pop %v980
      %v1013 = vtanh.pop %v983
      %v1014 = vtanh.pop %v988
      %v1015 = vtanh.pop %v991
      %v1016 = vtanh.pop %v996
      %v1017 = vtanh.pop %v999
      %v1018 = vpack.c.bf16 %v1003, %v1002
      %v1019 = vpack.c.bf16 %v1005, %v1004
      %v1020 = vpack.c.bf16 %v1007, %v1006
      %v1021 = vpack.c.bf16 %v1009, %v1008
      %v1022 = vpack.c.bf16 %v1011, %v1010
      %v1023 = vpack.c.bf16 %v1013, %v1012
      %v1024 = vpack.c.bf16 %v1015, %v1014
      %v1025 = vpack.c.bf16 %v1017, %v1016
      %v1026 = vld [vmem:[%s5] sm:$0xff]
      %v1027 = vld [vmem:[%s5 + $0x8] sm:$0xff]
      %v1028 = vld [vmem:[%s5 + $0x10] sm:$0xff]
      %v1029 = vld [vmem:[%s5 + $0x18] sm:$0xff]
      %v1030 = vpack.c.bf16 %v1027, %v1026
      %v1031 = vpack.c.bf16 %v1029, %v1028
      %v1032 = vld [vmem:[%s6] sm:$0x1]
      %v1034 = vlaneseq
      %v1035 = vshrl.u32 %v1034, 7
      %v1036 = vsub.s32 0, %v1035
      %v1037 = vrot.slane %v1032, %v1036
      %v1040 = vsel %vm560, %v1018, 0
      %v1043 = vsel %vm560, %v1019, 0
      %v1046 = vsel %vm560, %v1020, 0
      %v1049 = vsel %vm560, %v1021, 0
      %v1052 = vsel %vm560, %v1022, 0
      %v1055 = vsel %vm560, %v1023, 0
      %v1058 = vsel %vm560, %v1024, 0
      %v1061 = vsel %vm560, %v1025, 0
      %1063 = vmatprep.subr.bf16.mxu0 0
      %1064 = vmatpush1.bf16.msra.mxu0 0
      %1065 = vmatprep.subr.bf16.mxu0 0
      %1066 = vmatpush1.bf16.msra.mxu0 0
      %1067 = vmatprep.subr.bf16.mxu0 0
      %1068 = vmatpush1.bf16.msra.mxu0 0
      %1069 = vmatprep.subr.bf16.mxu0 0
      %1070 = vmatpush1.bf16.msra.mxu0 0
      %1071 = vmatprep.subr.bf16.mxu0 0
      %1072 = vmatpush1.bf16.msra.mxu0 0
      %1073 = vmatprep.subr.bf16.mxu0 0
      %1074 = vmatpush1.bf16.msra.mxu0 0
      %1075 = vmatprep.subr.bf16.mxu0 0
      %1076 = vmatpush1.bf16.msra.mxu0 %v1031
      %1077 = vmatprep.subr.bf16.mxu0 0
      %1078 = vmatpush1.bf16.msra.mxu0 %v1030
      %1079 = vmatprep.subr.bf16.mxu0 0
      %1080 = vmatpush2.bf16.msra.mxu0 0
      %1081 = vmatprep.subr.bf16.mxu0 0
      %1082 = vmatpush2.bf16.msra.mxu0 0
      %1083 = vmatprep.subr.bf16.mxu0 0
      %1084 = vmatpush2.bf16.msra.mxu0 0
      %1085 = vmatprep.subr.bf16.mxu0 0
      %1086 = vmatpush2.bf16.msra.mxu0 0
      %1087 = vmatprep.subr.bf16.mxu0 0
      %1088 = vmatpush2.bf16.msra.mxu0 0
      %1089 = vmatprep.subr.bf16.mxu0 0
      %1090 = vmatpush2.bf16.msra.mxu0 0
      %1091 = vmatprep.subr.bf16.mxu0 0
      %1092 = vmatpush2.bf16.msra.mxu0 0
      %1093 = vmatprep.subr.bf16.mxu0 0
      %1094 = vmatpush2.bf16.msra.mxu0 0
      %1095 = vmatprep.mubr.bf16.mxu0 0
      %1096 = vmatmul.mubr.bf16.gmra.mxu0 %v1040
      %v1097 = vpop.f32.mrf.mxu0
      %v1098 = vadd.f32 %v1037, %v1097
      %v1099 = vpop.f32.mrf.mxu0
      %v1100 = vpop.f32.mrf.mxu0
      %v1101 = vadd.f32 %v1037, %v1100
      %v1102 = vpop.f32.mrf.mxu0
      %1103 = vmatprep.mubr.bf16.mxu0 0
      %1104 = vmatmul.mubr.bf16.gmra.mxu0 %v1043
      %v1105 = vpop.f32.mrf.mxu0
      %v1106 = vadd.f32 %v1037, %v1105
      %v1107 = vpop.f32.mrf.mxu0
      %v1108 = vpop.f32.mrf.mxu0
      %v1109 = vadd.f32 %v1037, %v1108
      %v1110 = vpop.f32.mrf.mxu0
      %1111 = vmatprep.mubr.bf16.mxu0 0
      %1112 = vmatmul.mubr.bf16.gmra.mxu0 %v1046
      %v1113 = vpop.f32.mrf.mxu0
      %v1114 = vadd.f32 %v1037, %v1113
      %v1115 = vpop.f32.mrf.mxu0
      %v1116 = vpop.f32.mrf.mxu0
      %v1117 = vadd.f32 %v1037, %v1116
      %v1118 = vpop.f32.mrf.mxu0
      %1119 = vmatprep.mubr.bf16.mxu0 0
      %1120 = vmatmul.mubr.bf16.gmra.mxu0 %v1049
      %v1121 = vpop.f32.mrf.mxu0
      %v1122 = vadd.f32 %v1037, %v1121
      %v1123 = vpop.f32.mrf.mxu0
      %v1124 = vpop.f32.mrf.mxu0
      %v1125 = vadd.f32 %v1037, %v1124
      %v1126 = vpop.f32.mrf.mxu0
      %1127 = vmatprep.mubr.bf16.mxu0 0
      %1128 = vmatmul.mubr.bf16.gmra.mxu0 %v1052
      %v1129 = vpop.f32.mrf.mxu0
      %v1130 = vadd.f32 %v1037, %v1129
      %v1131 = vpop.f32.mrf.mxu0
      %v1132 = vpop.f32.mrf.mxu0
      %v1133 = vadd.f32 %v1037, %v1132
      %v1134 = vpop.f32.mrf.mxu0
      %1135 = vmatprep.mubr.bf16.mxu0 0
      %1136 = vmatmul.mubr.bf16.gmra.mxu0 %v1055
      %v1137 = vpop.f32.mrf.mxu0
      %v1138 = vadd.f32 %v1037, %v1137
      %v1139 = vpop.f32.mrf.mxu0
      %v1140 = vpop.f32.mrf.mxu0
      %v1141 = vadd.f32 %v1037, %v1140
      %v1142 = vpop.f32.mrf.mxu0
      %1143 = vmatprep.mubr.bf16.mxu0 0
      %1144 = vmatmul.mubr.bf16.gmra.mxu0 %v1058
      %v1145 = vpop.f32.mrf.mxu0
      %v1146 = vadd.f32 %v1037, %v1145
      %v1147 = vpop.f32.mrf.mxu0
      %v1148 = vpop.f32.mrf.mxu0
      %v1149 = vadd.f32 %v1037, %v1148
      %v1150 = vpop.f32.mrf.mxu0
      %1151 = vmatprep.mubr.bf16.mxu0 0
      %1152 = vmatmul.mubr.bf16.gmra.mxu0 %v1061
      %v1153 = vpop.f32.mrf.mxu0
      %v1154 = vadd.f32 %v1037, %v1153
      %v1155 = vpop.f32.mrf.mxu0
      %v1156 = vpop.f32.mrf.mxu0
      %v1157 = vadd.f32 %v1037, %v1156
      %v1158 = vpop.f32.mrf.mxu0
      %1159 = vdwg.mxu0
      %1160 = vst [vmem:[%s280] sm:$0xff] %v1098
      %1161 = vst [vmem:[%s280 + $0x8] sm:$0xff] %v1101
      %1162 = vst [vmem:[%s280 + $0x10] sm:$0xff] %v1106
      %1163 = vst [vmem:[%s280 + $0x18] sm:$0xff] %v1109
      %1164 = vst [vmem:[%s280 + $0x20] sm:$0xff] %v1114
      %1165 = vst [vmem:[%s280 + $0x28] sm:$0xff] %v1117
      %1166 = vst [vmem:[%s280 + $0x30] sm:$0xff] %v1122
      %1167 = vst [vmem:[%s280 + $0x38] sm:$0xff] %v1125
      %1168 = vst [vmem:[%s280 + $0x40] sm:$0xff] %v1130
      %1169 = vst [vmem:[%s280 + $0x48] sm:$0xff] %v1133
      %1170 = vst [vmem:[%s280 + $0x50] sm:$0xff] %v1138
      %1171 = vst [vmem:[%s280 + $0x58] sm:$0xff] %v1141
      %1172 = vst [vmem:[%s280 + $0x60] sm:$0xff] %v1146
      %1173 = vst [vmem:[%s280 + $0x68] sm:$0xff] %v1149
      %1174 = vst [vmem:[%s280 + $0x70] sm:$0xff] %v1154
      %1175 = vst [vmem:[%s280 + $0x78] sm:$0xff] %v1157
      %s1176 = smul.u32 16, %s18
      %p1177 = scmp.lt.s32.totalorder %s1176, 31
      %s1178 = scalar_select %p1177, %s1176, 31
      %s1179 = smul.addr %s1178, 8
      %s1180 = scalar_lea.vmem %s7, %s1179
      // Predicated region
      $region49: #{mul_layer_net.1} parent=47 // pred_check
        %p1181 = pneg %p188
      $region50: #{mul_layer_net.1} parent=47 // pred_check_branch
        %1183 = sbr.rel (%p1181) target = $region52
      $region51: #{mul_layer_net.1} parent=47 // pred_region
        %s1184 = smul.u32 16, %s18
      $region52: #{mul_layer_net.1} parent=47 // pred_fallthru
        _
    $region48: #{mul_layer_net.1} parent=5 // pred_fallthru
      _
    %p1185 = scmp.le.s32.totalorder 2, %s13
    // Predicated region
    $region53: #{mul_layer_net.1} parent=5 // pred_check
      %p1186 = pneg %p1185
    $region54: #{mul_layer_net.1} parent=5 // pred_check_branch
      %1188 = sbr.rel (%p1186) target = $region56
    $region55: #{mul_layer_net.1} parent=5 // pred_region
      %s1189 = ssub.s32 %s13, 2
      // Predicated region
      $region57: #{mul_layer_net.1} parent=55 // pred_check
        %p1190 = pneg %p194
      $region58: #{mul_layer_net.1} parent=55 // pred_check_branch
        %1192 = sbr.rel (%p1190) target = $region60
      $region59: #{mul_layer_net.1} parent=55 // pred_region
        %s1193 = smul.u32 16, %s19
        %p1194 = scmp.lt.s32.totalorder %s1193, 31
        %s1195 = scalar_select %p1194, %s1193, 31
        %s1196 = smul.addr %s1195, 8
        %s1197 = scalar_lea.vmem %s7, %s1196
      $region60: #{mul_layer_net.1} parent=55 // pred_fallthru
        _
    $region56: #{mul_layer_net.1} parent=5 // pred_fallthru
      _
  $region6: #{mul_layer_net.1} parent=0 // loop_footer
    %s17 = sadd.s32 1, %s13
  $region7: #{mul_layer_net.1} parent=0 // loop_footer_branch
    %12 = sbr.rel target = $region3
  $region8: #{mul_layer_net.1} parent=0 // loop_exit
    _

</llo_original>
